<compile_context>
chip_gen: v7x
topology: tpu7x:2x2x1
jax: 0.10.0
libtpu: 0.0.40
codegen_flags: <defaults>
</compile_context>

<pallas_src>
import functools

import jax
import jax.numpy as jnp
from jax.experimental import pallas as pl
from jax.experimental.pallas import tpu as pltpu

IN_DIM = 1024   # encoder input features
HID_DIM = 128   # bottleneck / code size
OUT_DIM = 1024  # decoder output features


def _round_up(x, m):
    return ((x + m - 1) // m) * m


def _choose_tile(batch, tb):
    """Batch tile: multiple of 8, <= round_up(batch, 8), megacore-friendly."""
    tb_eff = min(_round_up(tb, 8), _round_up(batch, 8))
    # v7x has 2 TensorCores: make sure the 'parallel' grid axis has >=2 steps
    # for mid-size batches and >=4 for large ones, but never shrink the tile
    # below 256 rows (streaming-efficiency floor for mem-bound kernels).
    if batch >= 2048:
        tb_eff = min(tb_eff, max(256, _round_up(-(-batch // 4), 8)))
    elif batch >= 512:
        tb_eff = min(tb_eff, max(256, _round_up(-(-batch // 2), 8)))
    return max(tb_eff, 8)


def _mlptomlp_kernel(x_ref, w1_ref, b1_ref, w2_ref, b2_ref,
                     out_ref, h_ref, *, training):
    """Fused encode -> decode (-> sigmoid) for one batch tile.

    x_ref  : [tb, 1024]   input tile (f32 or bf16)
    w1_ref : [1024, 128]  encoder weight, bf16, [in, out] (resident)
    b1_ref : [1, 128]     encoder bias, f32
    w2_ref : [128, 1024]  decoder weight, bf16, [in, out] (resident)
    b2_ref : [1, 1024]    decoder bias, f32
    out_ref: [tb, 1024]   reconstructed output (bf16 by default)
    h_ref  : [tb, 128]    latent code (bf16 by default)
    """
    # bf16 operands -> native-rate MXU; f32 accumulation via
    # preferred_element_type; bias add + sigmoid stay f32.
    x = x_ref[...].astype(jnp.bfloat16)

    # encode: h = x @ W1 + b1
    h = jnp.dot(x, w1_ref[...], preferred_element_type=jnp.float32) + b1_ref[...]
    h_ref[...] = h.astype(h_ref.dtype)

    # decode: out = h @ W2 + b2
    o = jnp.dot(h.astype(jnp.bfloat16), w2_ref[...],
                preferred_element_type=jnp.float32) + b2_ref[...]

    if not training:                 # eval-mode sigmoid (compile-time branch)
        o = jax.nn.sigmoid(o)        # exp goes to EUP — free vs. HBM streams

    out_ref[...] = o.astype(out_ref.dtype)


def mlptomlp_forward(x, w1, b1, w2, b2, *, training=False, tb=512,
                     out_dtype=jnp.bfloat16, h_dtype=jnp.bfloat16):
    """Tiles over the batch dimension and calls the fused kernel.

    x  : [B, 1024]  (f32 or, preferably for bandwidth, bf16)
    w1 : [1024, 128], b1: [128]    encoder params, stored [in, out]
    w2 : [128, 1024], b2: [1024]   decoder params, stored [in, out]
    Returns (output[B,1024], h[B,128]) matching the PyTorch forward.
    """
    B, F = x.shape
    assert F == IN_DIM

    tb_eff = _choose_tile(B, tb)
    grid = (pl.cdiv(B, tb_eff),)     # ragged batch: edge block is masked by
                                     # Pallas, no pad/slice HBM passes.

    # Weights resident across the whole grid: cast to bf16 once (halves their
    # VMEM footprint and puts them directly in MXU-native dtype).
    w1_bf = w1.astype(jnp.bfloat16)
    w2_bf = w2.astype(jnp.bfloat16)
    b1_2d = b1.reshape(1, HID_DIM).astype(jnp.float32)
    b2_2d = b2.reshape(1, OUT_DIM).astype(jnp.float32)

    kernel = functools.partial(_mlptomlp_kernel, training=training)

    out_shape = (
        jax.ShapeDtypeStruct((B, OUT_DIM), out_dtype),
        jax.ShapeDtypeStruct((B, HID_DIM), h_dtype),
    )

    out, h = pl.pallas_call(
        kernel,
        out_shape=out_shape,
        grid_spec=pltpu.PrefetchScalarGridSpec(
            num_scalar_prefetch=0,
            grid=grid,
            in_specs=[
                pl.BlockSpec((tb_eff, IN_DIM), lambda i: (i, 0)),     # x tile
                pl.BlockSpec((IN_DIM, HID_DIM), lambda i: (0, 0)),    # W1 (resident)
                pl.BlockSpec((1, HID_DIM), lambda i: (0, 0)),         # b1
                pl.BlockSpec((HID_DIM, OUT_DIM), lambda i: (0, 0)),   # W2 (resident)
                pl.BlockSpec((1, OUT_DIM), lambda i: (0, 0)),         # b2
            ],
            out_specs=[
                pl.BlockSpec((tb_eff, OUT_DIM), lambda i: (i, 0)),    # output
                pl.BlockSpec((tb_eff, HID_DIM), lambda i: (i, 0)),    # h (latent)
            ],
        ),
        compiler_params=pltpu.CompilerParams(
            dimension_semantics=("parallel",),   # lets v7x split tiles over 2 TCs
            vmem_limit_bytes=32 * 1024 * 1024,   # safe on v5e/v6e/v7x; fits tb<=1024
        ),
    )(x, w1_bf, b1_2d, w2_bf, b2_2d)

    return out, h


def init_params(key):
    """Deterministic init mimicking nn.Linear default (U(-1/sqrt(fan_in), ..))."""
    k1, k2, k3, k4 = jax.random.split(key, 4)
    bound1 = 1.0 / jnp.sqrt(jnp.float32(IN_DIM))
    bound2 = 1.0 / jnp.sqrt(jnp.float32(HID_DIM))
    # Stored as [in, out] (transposed vs. PyTorch's [out, in]) for the kernel.
    w1 = jax.random.uniform(k1, (IN_DIM, HID_DIM), jnp.float32, -bound1, bound1)
    b1 = jax.random.uniform(k2, (HID_DIM,), jnp.float32, -bound1, bound1)
    w2 = jax.random.uniform(k3, (HID_DIM, OUT_DIM), jnp.float32, -bound2, bound2)
    b2 = jax.random.uniform(k4, (OUT_DIM,), jnp.float32, -bound2, bound2)
    return w1, b1, w2, b2


def _reference(x, w1, b1, w2, b2, training=False,
               out_dtype=jnp.bfloat16, h_dtype=jnp.bfloat16):
    """Plain-JAX reference using the same bf16-operand / f32-accum recipe."""
    h = jnp.dot(x.astype(jnp.bfloat16), w1.astype(jnp.bfloat16),
                preferred_element_type=jnp.float32) + b1
    o = jnp.dot(h.astype(jnp.bfloat16), w2.astype(jnp.bfloat16),
                preferred_element_type=jnp.float32) + b2
    if not training:
        o = jax.nn.sigmoid(o)
    return o.astype(out_dtype), h.astype(h_dtype)


if __name__ == "__main__":
    key = jax.random.PRNGKey(0)
    kx, kp = jax.random.split(key)

    w1, b1, w2, b2 = init_params(kp)

    # Case 1: small batch (f32 input, single grid step).
    B = 8
    x = jax.random.normal(kx, (B, IN_DIM), jnp.float32)
    out, h = mlptomlp_forward(x, w1, b1, w2, b2, training=False)
    jax.block_until_ready((out, h))
    out_ref, h_ref = _reference(x, w1, b1, w2, b2, training=False)
    assert out.shape == (B, OUT_DIM) and h.shape == (B, HID_DIM)
    assert out.dtype == jnp.bfloat16 and h.dtype == jnp.bfloat16
    err_o = float(jnp.max(jnp.abs(out.astype(jnp.float32) - out_ref.astype(jnp.float32))))
    err_h = float(jnp.max(jnp.abs(h.astype(jnp.float32) - h_ref.astype(jnp.float32))))
    assert err_o < 1e-2, err_o
    assert err_h < 3e-2, err_h

    # Case 2: ragged batch, bf16 input, multi-step grid with a masked edge
    # block (exercises the pad-free cdiv grid + pipelining).
    B2 = 40
    x2 = jax.random.normal(jax.random.fold_in(kx, 1), (B2, IN_DIM),
                           jnp.float32).astype(jnp.bfloat16)
    out2, h2 = mlptomlp_forward(x2, w1, b1, w2, b2, training=False, tb=16)
    jax.block_until_ready((out2, h2))
    out2_ref, h2_ref = _reference(x2, w1, b1, w2, b2, training=False)
    assert out2.shape == (B2, OUT_DIM) and h2.shape == (B2, HID_DIM)
    err_o2 = float(jnp.max(jnp.abs(out2.astype(jnp.float32) - out2_ref.astype(jnp.float32))))
    err_h2 = float(jnp.max(jnp.abs(h2.astype(jnp.float32) - h2_ref.astype(jnp.float32))))
    assert err_o2 < 1e-2, err_o2
    assert err_h2 < 3e-2, err_h2

    print("KERNEL_OK")
</pallas_src>

<mosaic_0001>
module attributes {stable_mosaic.version = 11 : i64} {
  func.func @_mlptomlp_kernel(%arg0: i32, %arg1: memref<8x1024xf32, #tpu.memory_space<vmem>>, %arg2: memref<1024x128xbf16, #tpu.memory_space<vmem>>, %arg3: memref<1x128xf32, #tpu.memory_space<vmem>>, %arg4: memref<128x1024xbf16, #tpu.memory_space<vmem>>, %arg5: memref<1x1024xf32, #tpu.memory_space<vmem>>, %arg6: memref<8x1024xbf16, #tpu.memory_space<vmem>>, %arg7: memref<8x128xbf16, #tpu.memory_space<vmem>>) attributes {dimension_semantics = [#tpu.dimension_semantics<parallel>], iteration_bounds = array<i64: 1>, scalar_prefetch = 0 : i64, scratch_operands = 0 : i64, tpu.core_type = #tpu.core_type<tc>, window_params = [{transform_indices = @transform_0, window_bounds = array<i64: 8, 1024>}, {pipeline_mode = #tpu.pipeline_mode<synchronous>, transform_indices = @transform_1, window_bounds = array<i64: 1024, 128>}, {pipeline_mode = #tpu.pipeline_mode<synchronous>, transform_indices = @transform_2, window_bounds = array<i64: 1, 128>}, {pipeline_mode = #tpu.pipeline_mode<synchronous>, transform_indices = @transform_3, window_bounds = array<i64: 128, 1024>}, {pipeline_mode = #tpu.pipeline_mode<synchronous>, transform_indices = @transform_4, window_bounds = array<i64: 1, 1024>}, {transform_indices = @transform_5, window_bounds = array<i64: 8, 1024>}, {transform_indices = @transform_6, window_bounds = array<i64: 8, 128>}]} {
    %c0 = arith.constant 0 : index
    %c0_0 = arith.constant 0 : index
    %0 = vector.load %arg1[%c0, %c0_0] : memref<8x1024xf32, #tpu.memory_space<vmem>>, vector<8x1024xf32>
    %1 = arith.truncf %0 : vector<8x1024xf32> to vector<8x1024xbf16>
    %c0_1 = arith.constant 0 : index
    %c0_2 = arith.constant 0 : index
    %2 = vector.load %arg2[%c0_1, %c0_2] : memref<1024x128xbf16, #tpu.memory_space<vmem>>, vector<1024x128xbf16>
    %cst = arith.constant dense<0.000000e+00> : vector<8x128xf32>
    %3 = tpu.matmul %1, %2, %cst {dimension_numbers = #tpu.dot_dimension_numbers<[1], [0], [0], [1], [0, 0, 1, 1], [], []>} : vector<8x1024xbf16>, vector<1024x128xbf16>, vector<8x128xf32> -> vector<8x128xf32>
    %c0_3 = arith.constant 0 : index
    %c0_4 = arith.constant 0 : index
    %4 = vector.load %arg3[%c0_3, %c0_4] : memref<1x128xf32, #tpu.memory_space<vmem>>, vector<1x128xf32>
    %5 = vector.broadcast %4 : vector<1x128xf32> to vector<8x128xf32>
    %6 = arith.addf %3, %5 : vector<8x128xf32>
    %7 = arith.truncf %6 : vector<8x128xf32> to vector<8x128xbf16>
    %c0_5 = arith.constant 0 : index
    %c0_6 = arith.constant 0 : index
    %8 = vector.load %arg7[%c0_5, %c0_6] : memref<8x128xbf16, #tpu.memory_space<vmem>>, vector<8x128xbf16>
    tpu.vector_store %arg7[%c0_5, %c0_6], %7 {strides = array<i32>} : memref<8x128xbf16, #tpu.memory_space<vmem>>, vector<8x128xbf16>,
    %9 = arith.truncf %6 : vector<8x128xf32> to vector<8x128xbf16>
    %c0_7 = arith.constant 0 : index
    %c0_8 = arith.constant 0 : index
    %10 = vector.load %arg4[%c0_7, %c0_8] : memref<128x1024xbf16, #tpu.memory_space<vmem>>, vector<128x1024xbf16>
    %cst_9 = arith.constant dense<0.000000e+00> : vector<8x1024xf32>
    %11 = tpu.matmul %9, %10, %cst_9 {dimension_numbers = #tpu.dot_dimension_numbers<[1], [0], [0], [1], [0, 0, 1, 1], [], []>} : vector<8x128xbf16>, vector<128x1024xbf16>, vector<8x1024xf32> -> vector<8x1024xf32>
    %c0_10 = arith.constant 0 : index
    %c0_11 = arith.constant 0 : index
    %12 = vector.load %arg5[%c0_10, %c0_11] : memref<1x1024xf32, #tpu.memory_space<vmem>>, vector<1x1024xf32>
    %13 = vector.broadcast %12 : vector<1x1024xf32> to vector<8x1024xf32>
    %14 = arith.addf %11, %13 : vector<8x1024xf32>
    %15 = arith.negf %14 : vector<8x1024xf32>
    %16 = math.exp %15 : vector<8x1024xf32>
    %cst_12 = arith.constant 1.000000e+00 : f32
    %17 = vector.broadcast %cst_12 : f32 to vector<8x1024xf32>
    %18 = arith.addf %17, %16 : vector<8x1024xf32>
    %19 = arith.divf %17, %18 : vector<8x1024xf32>
    %20 = arith.truncf %19 : vector<8x1024xf32> to vector<8x1024xbf16>
    %c0_13 = arith.constant 0 : index
    %c0_14 = arith.constant 0 : index
    %21 = vector.load %arg6[%c0_13, %c0_14] : memref<8x1024xbf16, #tpu.memory_space<vmem>>, vector<8x1024xbf16>
    tpu.vector_store %arg6[%c0_13, %c0_14], %20 {strides = array<i32>} : memref<8x1024xbf16, #tpu.memory_space<vmem>>, vector<8x1024xbf16>,
    return
  }
  func.func @transform_0(%arg0: i32) -> (i32, i32) {
    %c0_i32 = arith.constant 0 : i32
    %c0_i32_0 = arith.constant 0 : i32
    return %arg0, %c0_i32 : i32, i32
  }
  func.func @transform_1(%arg0: i32) -> (i32, i32) {
    %c0_i32 = arith.constant 0 : i32
    %c0_i32_0 = arith.constant 0 : i32
    %c0_i32_1 = arith.constant 0 : i32
    return %c0_i32, %c0_i32_0 : i32, i32
  }
  func.func @transform_2(%arg0: i32) -> (i32, i32) {
    %c0_i32 = arith.constant 0 : i32
    %c0_i32_0 = arith.constant 0 : i32
    %c0_i32_1 = arith.constant 0 : i32
    return %c0_i32, %c0_i32_0 : i32, i32
  }
  func.func @transform_3(%arg0: i32) -> (i32, i32) {
    %c0_i32 = arith.constant 0 : i32
    %c0_i32_0 = arith.constant 0 : i32
    %c0_i32_1 = arith.constant 0 : i32
    return %c0_i32, %c0_i32_0 : i32, i32
  }
  func.func @transform_4(%arg0: i32) -> (i32, i32) {
    %c0_i32 = arith.constant 0 : i32
    %c0_i32_0 = arith.constant 0 : i32
    %c0_i32_1 = arith.constant 0 : i32
    return %c0_i32, %c0_i32_0 : i32, i32
  }
  func.func @transform_5(%arg0: i32) -> (i32, i32) {
    %c0_i32 = arith.constant 0 : i32
    %c0_i32_0 = arith.constant 0 : i32
    return %arg0, %c0_i32 : i32, i32
  }
  func.func @transform_6(%arg0: i32) -> (i32, i32) {
    %c0_i32 = arith.constant 0 : i32
    %c0_i32_0 = arith.constant 0 : i32
    return %arg0, %c0_i32 : i32, i32
  }
}

</mosaic_0001>

<llo_original>
// kernel: tpu_custom_call.1
$region0: #{tpu_custom_call.1}
  #allocation0 [shape = 'u32[]', space=smem, size = 0x4, offset = 0x4, fixed_abs, tag = 'smem constant byte address 0x4 - core index']
  #allocation1 [shape = 'u32[144,128]{1,0:T(1,128)}', space=vmem, size = 0x12000, scoped, tag = 'internal scratch']
  %s0 = inlined_call_operand.hbm [shape: f32[8,1024], index: 0, kind: input, shape index: {}]
  %s1 = inlined_call_operand.hbm [shape: bf16[1024,128], index: 1, kind: input, shape index: {}]
  %s2 = inlined_call_operand.vmem [shape: f32[1,128], index: 2, kind: input, shape index: {}]
  %s3 = inlined_call_operand.hbm [shape: bf16[128,1024], index: 3, kind: input, shape index: {}]
  %s4 = inlined_call_operand.vmem [shape: f32[1,1024], index: 4, kind: input, shape index: {}]
  %s5 = inlined_call_operand.hbm [shape: bf16[8,1024], index: 5, kind: output, shape index: {0}]
  %s6 = inlined_call_operand.hbm [shape: bf16[8,128], index: 6, kind: output, shape index: {1}]
  %7 = xla_tuple %s5, %s6
  %s8 = sld [smem:[#allocation0]]
  $region50: #{tpu_custom_call.1} parent=0
    _
  %s10 = ssub.s32 1, %s8
  %s11 = scalar_select 0, %s10, %s8
  $region1: #{tpu_custom_call.1} parent=0
    #allocation2 [shape = 'u8[32768]{0}', space=vmem, size = 0x8000, scoped, tag = 'input window, operand 0, single buffered']
    #allocation3 [shape = 's32[1]{0}', space=sflag, size = 0x4, scoped, tag = 'scoped memory for tpu_custom_call.1']
    #allocation4 [shape = 's32[1]{0}', space=sflag, size = 0x4, scoped, tag = 'scoped memory for tpu_custom_call.1']
    #allocation5 [shape = 'u8[262144]{0}', space=vmem, size = 0x40000, scoped, tag = 'input window, operand 1, single buffered']
    #allocation6 [shape = 's32[1]{0}', space=sflag, size = 0x4, scoped, tag = 'scoped memory for tpu_custom_call.1']
    #allocation7 [shape = 'u8[262144]{0}', space=vmem, size = 0x40000, scoped, tag = 'input window, operand 3, single buffered']
    #allocation8 [shape = 'u8[16384]{0}', space=vmem, size = 0x4000, scoped, tag = 'output window, operand 0, single buffered']
    #allocation9 [shape = 'u8[2048]{0}', space=vmem, size = 0x800, scoped, tag = 'output window, operand 1, single buffered']
    #allocation10 [shape = 's32[1]{0}', space=sflag, size = 0x4, scoped, tag = 'scoped memory for tpu_custom_call.1']
    %12 = vsyncpa [#allocation3], 0
    %13 = vsyncpa [#allocation6], 0
    %14 = vsyncpa [#allocation4], 0
    %15 = vsyncpa [#allocation10], 0
    // Predicated region
    $region2: #{tpu_custom_call.1} parent=1 // pred_check
      _
    $region3: #{tpu_custom_call.1} parent=1 // pred_check_branch
      %17 = sbr.rel (0) target = $region5
    $region4: #{tpu_custom_call.1} parent=1 // pred_region
      %s19 = ssub.s32 1024, 1024
      %20 = vsyncadd [#allocation3], %s19
      %s22 = sshll.u32 [#allocation2], 4
      %s23 = int_to_ptr.vmem [resolvable:$true] %s22
      %25 = dma.hbm_to_vmem [thread:$0]  %s0, 1024, %s23, [#allocation3]
    $region5: #{tpu_custom_call.1} parent=1 // pred_fallthru
      _
    // Predicated region
    $region6: #{tpu_custom_call.1} parent=1 // pred_check
      _
    $region7: #{tpu_custom_call.1} parent=1 // pred_check_branch
      %27 = sbr.rel (0) target = $region9
    $region8: #{tpu_custom_call.1} parent=1 // pred_region
      %s29 = ssub.s32 8192, 8192
      %30 = vsyncadd [#allocation6], %s29
      %s31 = sshll.u32 [#allocation5], 4
      %s32 = int_to_ptr.vmem [resolvable:$true] %s31
      %37 = dma.hbm_to_vmem [thread:$0]  %s1, 8192, %s32, [#allocation6], 64, 64, 4
    $region9: #{tpu_custom_call.1} parent=1 // pred_fallthru
      _
    // Predicated region
    $region10: #{tpu_custom_call.1} parent=1 // pred_check
      _
    $region11: #{tpu_custom_call.1} parent=1 // pred_check_branch
      %39 = sbr.rel (0) target = $region13
    $region12: #{tpu_custom_call.1} parent=1 // pred_region
      _
    $region13: #{tpu_custom_call.1} parent=1 // pred_fallthru
      _
    // Predicated region
    $region14: #{tpu_custom_call.1} parent=1 // pred_check
      _
    $region15: #{tpu_custom_call.1} parent=1 // pred_check_branch
      %41 = sbr.rel (0) target = $region17
    $region16: #{tpu_custom_call.1} parent=1 // pred_region
      %s43 = ssub.s32 8192, 8192
      %44 = vsyncadd [#allocation6], %s43
      %s45 = sshll.u32 [#allocation7], 4
      %s46 = int_to_ptr.vmem [resolvable:$true] %s45
      %51 = dma.hbm_to_vmem [thread:$0]  %s3, 8192, %s46, [#allocation6], 512, 512, 32
    $region17: #{tpu_custom_call.1} parent=1 // pred_fallthru
      _
    // Predicated region
    $region18: #{tpu_custom_call.1} parent=1 // pred_check
      _
    $region19: #{tpu_custom_call.1} parent=1 // pred_check_branch
      %53 = sbr.rel (0) target = $region21
    $region20: #{tpu_custom_call.1} parent=1 // pred_region
      _
    $region21: #{tpu_custom_call.1} parent=1 // pred_fallthru
      _
    // Predicated region
    $region22: #{tpu_custom_call.1} parent=1 // pred_check
      _
    $region23: #{tpu_custom_call.1} parent=1 // pred_check_branch
      %55 = sbr.rel (0) target = $region25
    $region24: #{tpu_custom_call.1} parent=1 // pred_region
      %56 = dma.done [#allocation3], 1024
    $region25: #{tpu_custom_call.1} parent=1 // pred_fallthru
      _
    // Predicated region
    $region26: #{tpu_custom_call.1} parent=1 // pred_check
      _
    $region27: #{tpu_custom_call.1} parent=1 // pred_check_branch
      %58 = sbr.rel (0) target = $region29
    $region28: #{tpu_custom_call.1} parent=1 // pred_region
      %59 = dma.done [#allocation6], 8192
    $region29: #{tpu_custom_call.1} parent=1 // pred_fallthru
      _
    // Predicated region
    $region30: #{tpu_custom_call.1} parent=1 // pred_check
      _
    $region31: #{tpu_custom_call.1} parent=1 // pred_check_branch
      %61 = sbr.rel (0) target = $region33
    $region32: #{tpu_custom_call.1} parent=1 // pred_region
      %62 = dma.done [#allocation6], 8192
    $region33: #{tpu_custom_call.1} parent=1 // pred_fallthru
      _
    %v64 = vld [vmem:[#allocation2] sm:$0xff]
    %v65 = vld [vmem:[#allocation2 + $0x8] sm:$0xff]
    %v66 = vld [vmem:[#allocation2 + $0x10] sm:$0xff]
    %v67 = vld [vmem:[#allocation2 + $0x18] sm:$0xff]
    %v68 = vld [vmem:[#allocation2 + $0x20] sm:$0xff]
    %v69 = vld [vmem:[#allocation2 + $0x28] sm:$0xff]
    %v70 = vld [vmem:[#allocation2 + $0x30] sm:$0xff]
    %v71 = vld [vmem:[#allocation2 + $0x38] sm:$0xff]
    %v72 = vpack.c.bf16 %v64, %v64
    %v73 = vpack.c.bf16 %v65, %v65
    %v74 = vpack.c.bf16 %v66, %v66
    %v75 = vpack.c.bf16 %v67, %v67
    %v76 = vpack.c.bf16 %v68, %v68
    %v77 = vpack.c.bf16 %v69, %v69
    %v78 = vpack.c.bf16 %v70, %v70
    %v79 = vpack.c.bf16 %v71, %v71
    %v80 = vld [vmem:[#allocation5] sm:$0xf]
    %v81 = vld [vmem:[#allocation5 + $0x4] sm:$0xf]
    %v82 = vld [vmem:[#allocation5 + $0x8] sm:$0xf]
    %v83 = vld [vmem:[#allocation5 + $0xc] sm:$0xf]
    %v84 = vld [vmem:[#allocation5 + $0x10] sm:$0xf]
    %v85 = vld [vmem:[#allocation5 + $0x14] sm:$0xf]
    %v86 = vld [vmem:[#allocation5 + $0x18] sm:$0xf]
    %v87 = vld [vmem:[#allocation5 + $0x1c] sm:$0xf]
    %v88 = vld [vmem:[#allocation5 + $0x20] sm:$0xf]
    %v89 = vld [vmem:[#allocation5 + $0x24] sm:$0xf]
    %v90 = vld [vmem:[#allocation5 + $0x28] sm:$0xf]
    %v91 = vld [vmem:[#allocation5 + $0x2c] sm:$0xf]
    %v92 = vld [vmem:[#allocation5 + $0x30] sm:$0xf]
    %v93 = vld [vmem:[#allocation5 + $0x34] sm:$0xf]
    %v94 = vld [vmem:[#allocation5 + $0x38] sm:$0xf]
    %v95 = vld [vmem:[#allocation5 + $0x3c] sm:$0xf]
    %v96 = vld [vmem:[#allocation5 + $0x40] sm:$0xf]
    %v97 = vld [vmem:[#allocation5 + $0x44] sm:$0xf]
    %v98 = vld [vmem:[#allocation5 + $0x48] sm:$0xf]
    %v99 = vld [vmem:[#allocation5 + $0x4c] sm:$0xf]
    %v100 = vld [vmem:[#allocation5 + $0x50] sm:$0xf]
    %v101 = vld [vmem:[#allocation5 + $0x54] sm:$0xf]
    %v102 = vld [vmem:[#allocation5 + $0x58] sm:$0xf]
    %v103 = vld [vmem:[#allocation5 + $0x5c] sm:$0xf]
    %v104 = vld [vmem:[#allocation5 + $0x60] sm:$0xf]
    %v105 = vld [vmem:[#allocation5 + $0x64] sm:$0xf]
    %v106 = vld [vmem:[#allocation5 + $0x68] sm:$0xf]
    %v107 = vld [vmem:[#allocation5 + $0x6c] sm:$0xf]
    %v108 = vld [vmem:[#allocation5 + $0x70] sm:$0xf]
    %v109 = vld [vmem:[#allocation5 + $0x74] sm:$0xf]
    %v110 = vld [vmem:[#allocation5 + $0x78] sm:$0xf]
    %v111 = vld [vmem:[#allocation5 + $0x7c] sm:$0xf]
    %v112 = vld [vmem:[#allocation5 + $0x80] sm:$0xf]
    %v113 = vld [vmem:[#allocation5 + $0x84] sm:$0xf]
    %v114 = vld [vmem:[#allocation5 + $0x88] sm:$0xf]
    %v115 = vld [vmem:[#allocation5 + $0x8c] sm:$0xf]
    %v116 = vld [vmem:[#allocation5 + $0x90] sm:$0xf]
    %v117 = vld [vmem:[#allocation5 + $0x94] sm:$0xf]
    %v118 = vld [vmem:[#allocation5 + $0x98] sm:$0xf]
    %v119 = vld [vmem:[#allocation5 + $0x9c] sm:$0xf]
    %v120 = vld [vmem:[#allocation5 + $0xa0] sm:$0xf]
    %v121 = vld [vmem:[#allocation5 + $0xa4] sm:$0xf]
    %v122 = vld [vmem:[#allocation5 + $0xa8] sm:$0xf]
    %v123 = vld [vmem:[#allocation5 + $0xac] sm:$0xf]
    %v124 = vld [vmem:[#allocation5 + $0xb0] sm:$0xf]
    %v125 = vld [vmem:[#allocation5 + $0xb4] sm:$0xf]
    %v126 = vld [vmem:[#allocation5 + $0xb8] sm:$0xf]
    %v127 = vld [vmem:[#allocation5 + $0xbc] sm:$0xf]
    %v128 = vld [vmem:[#allocation5 + $0xc0] sm:$0xf]
    %v129 = vld [vmem:[#allocation5 + $0xc4] sm:$0xf]
    %v130 = vld [vmem:[#allocation5 + $0xc8] sm:$0xf]
    %v131 = vld [vmem:[#allocation5 + $0xcc] sm:$0xf]
    %v132 = vld [vmem:[#allocation5 + $0xd0] sm:$0xf]
    %v133 = vld [vmem:[#allocation5 + $0xd4] sm:$0xf]
    %v134 = vld [vmem:[#allocation5 + $0xd8] sm:$0xf]
    %v135 = vld [vmem:[#allocation5 + $0xdc] sm:$0xf]
    %v136 = vld [vmem:[#allocation5 + $0xe0] sm:$0xf]
    %v137 = vld [vmem:[#allocation5 + $0xe4] sm:$0xf]
    %v138 = vld [vmem:[#allocation5 + $0xe8] sm:$0xf]
    %v139 = vld [vmem:[#allocation5 + $0xec] sm:$0xf]
    %v140 = vld [vmem:[#allocation5 + $0xf0] sm:$0xf]
    %v141 = vld [vmem:[#allocation5 + $0xf4] sm:$0xf]
    %v142 = vld [vmem:[#allocation5 + $0xf8] sm:$0xf]
    %v143 = vld [vmem:[#allocation5 + $0xfc] sm:$0xf]
    %v144 = vld [vmem:[#allocation5 + $0x100] sm:$0xf]
    %v145 = vld [vmem:[#allocation5 + $0x104] sm:$0xf]
    %v146 = vld [vmem:[#allocation5 + $0x108] sm:$0xf]
    %v147 = vld [vmem:[#allocation5 + $0x10c] sm:$0xf]
    %v148 = vld [vmem:[#allocation5 + $0x110] sm:$0xf]
    %v149 = vld [vmem:[#allocation5 + $0x114] sm:$0xf]
    %v150 = vld [vmem:[#allocation5 + $0x118] sm:$0xf]
    %v151 = vld [vmem:[#allocation5 + $0x11c] sm:$0xf]
    %v152 = vld [vmem:[#allocation5 + $0x120] sm:$0xf]
    %v153 = vld [vmem:[#allocation5 + $0x124] sm:$0xf]
    %v154 = vld [vmem:[#allocation5 + $0x128] sm:$0xf]
    %v155 = vld [vmem:[#allocation5 + $0x12c] sm:$0xf]
    %v156 = vld [vmem:[#allocation5 + $0x130] sm:$0xf]
    %v157 = vld [vmem:[#allocation5 + $0x134] sm:$0xf]
    %v158 = vld [vmem:[#allocation5 + $0x138] sm:$0xf]
    %v159 = vld [vmem:[#allocation5 + $0x13c] sm:$0xf]
    %v160 = vld [vmem:[#allocation5 + $0x140] sm:$0xf]
    %v161 = vld [vmem:[#allocation5 + $0x144] sm:$0xf]
    %v162 = vld [vmem:[#allocation5 + $0x148] sm:$0xf]
    %v163 = vld [vmem:[#allocation5 + $0x14c] sm:$0xf]
    %v164 = vld [vmem:[#allocation5 + $0x150] sm:$0xf]
    %v165 = vld [vmem:[#allocation5 + $0x154] sm:$0xf]
    %v166 = vld [vmem:[#allocation5 + $0x158] sm:$0xf]
    %v167 = vld [vmem:[#allocation5 + $0x15c] sm:$0xf]
    %v168 = vld [vmem:[#allocation5 + $0x160] sm:$0xf]
    %v169 = vld [vmem:[#allocation5 + $0x164] sm:$0xf]
    %v170 = vld [vmem:[#allocation5 + $0x168] sm:$0xf]
    %v171 = vld [vmem:[#allocation5 + $0x16c] sm:$0xf]
    %v172 = vld [vmem:[#allocation5 + $0x170] sm:$0xf]
    %v173 = vld [vmem:[#allocation5 + $0x174] sm:$0xf]
    %v174 = vld [vmem:[#allocation5 + $0x178] sm:$0xf]
    %v175 = vld [vmem:[#allocation5 + $0x17c] sm:$0xf]
    %v176 = vld [vmem:[#allocation5 + $0x180] sm:$0xf]
    %v177 = vld [vmem:[#allocation5 + $0x184] sm:$0xf]
    %v178 = vld [vmem:[#allocation5 + $0x188] sm:$0xf]
    %v179 = vld [vmem:[#allocation5 + $0x18c] sm:$0xf]
    %v180 = vld [vmem:[#allocation5 + $0x190] sm:$0xf]
    %v181 = vld [vmem:[#allocation5 + $0x194] sm:$0xf]
    %v182 = vld [vmem:[#allocation5 + $0x198] sm:$0xf]
    %v183 = vld [vmem:[#allocation5 + $0x19c] sm:$0xf]
    %v184 = vld [vmem:[#allocation5 + $0x1a0] sm:$0xf]
    %v185 = vld [vmem:[#allocation5 + $0x1a4] sm:$0xf]
    %v186 = vld [vmem:[#allocation5 + $0x1a8] sm:$0xf]
    %v187 = vld [vmem:[#allocation5 + $0x1ac] sm:$0xf]
    %v188 = vld [vmem:[#allocation5 + $0x1b0] sm:$0xf]
    %v189 = vld [vmem:[#allocation5 + $0x1b4] sm:$0xf]
    %v190 = vld [vmem:[#allocation5 + $0x1b8] sm:$0xf]
    %v191 = vld [vmem:[#allocation5 + $0x1bc] sm:$0xf]
    %v192 = vld [vmem:[#allocation5 + $0x1c0] sm:$0xf]
    %v193 = vld [vmem:[#allocation5 + $0x1c4] sm:$0xf]
    %v194 = vld [vmem:[#allocation5 + $0x1c8] sm:$0xf]
    %v195 = vld [vmem:[#allocation5 + $0x1cc] sm:$0xf]
    %v196 = vld [vmem:[#allocation5 + $0x1d0] sm:$0xf]
    %v197 = vld [vmem:[#allocation5 + $0x1d4] sm:$0xf]
    %v198 = vld [vmem:[#allocation5 + $0x1d8] sm:$0xf]
    %v199 = vld [vmem:[#allocation5 + $0x1dc] sm:$0xf]
    %v200 = vld [vmem:[#allocation5 + $0x1e0] sm:$0xf]
    %v201 = vld [vmem:[#allocation5 + $0x1e4] sm:$0xf]
    %v202 = vld [vmem:[#allocation5 + $0x1e8] sm:$0xf]
    %v203 = vld [vmem:[#allocation5 + $0x1ec] sm:$0xf]
    %v204 = vld [vmem:[#allocation5 + $0x1f0] sm:$0xf]
    %v205 = vld [vmem:[#allocation5 + $0x1f4] sm:$0xf]
    %v206 = vld [vmem:[#allocation5 + $0x1f8] sm:$0xf]
    %v207 = vld [vmem:[#allocation5 + $0x1fc] sm:$0xf]
    %v208 = vld [vmem:[%s2] sm:$0x1]
    %v210 = vlaneseq
    %v211 = vshrl.u32 %v210, 7
    %v212 = vsub.s32 0, %v211
    %v213 = vrot.slane %v208, %v212
    %v343 = vunpack.c.l.b16 %v80
    %v344 = vunpack.c.l.b16 %v81
    %v345 = vunpack.c.l.b16 %v82
    %v346 = vunpack.c.l.b16 %v83
    %v347 = vunpack.c.l.b16 %v84
    %v348 = vunpack.c.l.b16 %v85
    %v349 = vunpack.c.l.b16 %v86
    %v350 = vunpack.c.l.b16 %v87
    %v351 = vunpack.c.l.b16 %v88
    %v352 = vunpack.c.l.b16 %v89
    %v353 = vunpack.c.l.b16 %v90
    %v354 = vunpack.c.l.b16 %v91
    %v355 = vunpack.c.l.b16 %v92
    %v356 = vunpack.c.l.b16 %v93
    %v357 = vunpack.c.l.b16 %v94
    %v358 = vunpack.c.l.b16 %v95
    %v359 = vunpack.c.l.b16 %v96
    %v360 = vunpack.c.l.b16 %v97
    %v361 = vunpack.c.l.b16 %v98
    %v362 = vunpack.c.l.b16 %v99
    %v363 = vunpack.c.l.b16 %v100
    %v364 = vunpack.c.l.b16 %v101
    %v365 = vunpack.c.l.b16 %v102
    %v366 = vunpack.c.l.b16 %v103
    %v367 = vunpack.c.l.b16 %v104
    %v368 = vunpack.c.l.b16 %v105
    %v369 = vunpack.c.l.b16 %v106
    %v370 = vunpack.c.l.b16 %v107
    %v371 = vunpack.c.l.b16 %v108
    %v372 = vunpack.c.l.b16 %v109
    %v373 = vunpack.c.l.b16 %v110
    %v374 = vunpack.c.l.b16 %v111
    %v375 = vunpack.c.l.b16 %v112
    %v376 = vunpack.c.l.b16 %v113
    %v377 = vunpack.c.l.b16 %v114
    %v378 = vunpack.c.l.b16 %v115
    %v379 = vunpack.c.l.b16 %v116
    %v380 = vunpack.c.l.b16 %v117
    %v381 = vunpack.c.l.b16 %v118
    %v382 = vunpack.c.l.b16 %v119
    %v383 = vunpack.c.l.b16 %v120
    %v384 = vunpack.c.l.b16 %v121
    %v385 = vunpack.c.l.b16 %v122
    %v386 = vunpack.c.l.b16 %v123
    %v387 = vunpack.c.l.b16 %v124
    %v388 = vunpack.c.l.b16 %v125
    %v389 = vunpack.c.l.b16 %v126
    %v390 = vunpack.c.l.b16 %v127
    %v391 = vunpack.c.l.b16 %v128
    %v392 = vunpack.c.l.b16 %v129
    %v393 = vunpack.c.l.b16 %v130
    %v394 = vunpack.c.l.b16 %v131
    %v395 = vunpack.c.l.b16 %v132
    %v396 = vunpack.c.l.b16 %v133
    %v397 = vunpack.c.l.b16 %v134
    %v398 = vunpack.c.l.b16 %v135
    %v399 = vunpack.c.l.b16 %v136
    %v400 = vunpack.c.l.b16 %v137
    %v401 = vunpack.c.l.b16 %v138
    %v402 = vunpack.c.l.b16 %v139
    %v403 = vunpack.c.l.b16 %v140
    %v404 = vunpack.c.l.b16 %v141
    %v405 = vunpack.c.l.b16 %v142
    %v406 = vunpack.c.l.b16 %v143
    %v407 = vunpack.c.l.b16 %v144
    %v408 = vunpack.c.l.b16 %v145
    %v409 = vunpack.c.l.b16 %v146
    %v410 = vunpack.c.l.b16 %v147
    %v411 = vunpack.c.l.b16 %v148
    %v412 = vunpack.c.l.b16 %v149
    %v413 = vunpack.c.l.b16 %v150
    %v414 = vunpack.c.l.b16 %v151
    %v415 = vunpack.c.l.b16 %v152
    %v416 = vunpack.c.l.b16 %v153
    %v417 = vunpack.c.l.b16 %v154
    %v418 = vunpack.c.l.b16 %v155
    %v419 = vunpack.c.l.b16 %v156
    %v420 = vunpack.c.l.b16 %v157
    %v421 = vunpack.c.l.b16 %v158
    %v422 = vunpack.c.l.b16 %v159
    %v423 = vunpack.c.l.b16 %v160
    %v424 = vunpack.c.l.b16 %v161
    %v425 = vunpack.c.l.b16 %v162
    %v426 = vunpack.c.l.b16 %v163
    %v427 = vunpack.c.l.b16 %v164
    %v428 = vunpack.c.l.b16 %v165
    %v429 = vunpack.c.l.b16 %v166
    %v430 = vunpack.c.l.b16 %v167
    %v431 = vunpack.c.l.b16 %v168
    %v432 = vunpack.c.l.b16 %v169
    %v433 = vunpack.c.l.b16 %v170
    %v434 = vunpack.c.l.b16 %v171
    %v435 = vunpack.c.l.b16 %v172
    %v436 = vunpack.c.l.b16 %v173
    %v437 = vunpack.c.l.b16 %v174
    %v438 = vunpack.c.l.b16 %v175
    %v439 = vunpack.c.l.b16 %v176
    %v440 = vunpack.c.l.b16 %v177
    %v441 = vunpack.c.l.b16 %v178
    %v442 = vunpack.c.l.b16 %v179
    %v443 = vunpack.c.l.b16 %v180
    %v444 = vunpack.c.l.b16 %v181
    %v445 = vunpack.c.l.b16 %v182
    %v446 = vunpack.c.l.b16 %v183
    %v447 = vunpack.c.l.b16 %v184
    %v448 = vunpack.c.l.b16 %v185
    %v449 = vunpack.c.l.b16 %v186
    %v450 = vunpack.c.l.b16 %v187
    %v451 = vunpack.c.l.b16 %v188
    %v452 = vunpack.c.l.b16 %v189
    %v453 = vunpack.c.l.b16 %v190
    %v454 = vunpack.c.l.b16 %v191
    %v455 = vunpack.c.l.b16 %v192
    %v456 = vunpack.c.l.b16 %v193
    %v457 = vunpack.c.l.b16 %v194
    %v458 = vunpack.c.l.b16 %v195
    %v459 = vunpack.c.l.b16 %v196
    %v460 = vunpack.c.l.b16 %v197
    %v461 = vunpack.c.l.b16 %v198
    %v462 = vunpack.c.l.b16 %v199
    %v463 = vunpack.c.l.b16 %v200
    %v464 = vunpack.c.l.b16 %v201
    %v465 = vunpack.c.l.b16 %v202
    %v466 = vunpack.c.l.b16 %v203
    %v467 = vunpack.c.l.b16 %v204
    %v468 = vunpack.c.l.b16 %v205
    %v469 = vunpack.c.l.b16 %v206
    %v470 = vunpack.c.l.b16 %v207
    %v471 = vpack.c.b16 %v344, %v343
    %v472 = vpack.c.b16 %v346, %v345
    %v473 = vpack.c.b16 %v348, %v347
    %v474 = vpack.c.b16 %v350, %v349
    %v475 = vpack.c.b16 %v352, %v351
    %v476 = vpack.c.b16 %v354, %v353
    %v477 = vpack.c.b16 %v356, %v355
    %v478 = vpack.c.b16 %v358, %v357
    %v479 = vpack.c.b16 %v360, %v359
    %v480 = vpack.c.b16 %v362, %v361
    %v481 = vpack.c.b16 %v364, %v363
    %v482 = vpack.c.b16 %v366, %v365
    %v483 = vpack.c.b16 %v368, %v367
    %v484 = vpack.c.b16 %v370, %v369
    %v485 = vpack.c.b16 %v372, %v371
    %v486 = vpack.c.b16 %v374, %v373
    %v487 = vpack.c.b16 %v376, %v375
    %v488 = vpack.c.b16 %v378, %v377
    %v489 = vpack.c.b16 %v380, %v379
    %v490 = vpack.c.b16 %v382, %v381
    %v491 = vpack.c.b16 %v384, %v383
    %v492 = vpack.c.b16 %v386, %v385
    %v493 = vpack.c.b16 %v388, %v387
    %v494 = vpack.c.b16 %v390, %v389
    %v495 = vpack.c.b16 %v392, %v391
    %v496 = vpack.c.b16 %v394, %v393
    %v497 = vpack.c.b16 %v396, %v395
    %v498 = vpack.c.b16 %v398, %v397
    %v499 = vpack.c.b16 %v400, %v399
    %v500 = vpack.c.b16 %v402, %v401
    %v501 = vpack.c.b16 %v404, %v403
    %v502 = vpack.c.b16 %v406, %v405
    %v503 = vpack.c.b16 %v408, %v407
    %v504 = vpack.c.b16 %v410, %v409
    %v505 = vpack.c.b16 %v412, %v411
    %v506 = vpack.c.b16 %v414, %v413
    %v507 = vpack.c.b16 %v416, %v415
    %v508 = vpack.c.b16 %v418, %v417
    %v509 = vpack.c.b16 %v420, %v419
    %v510 = vpack.c.b16 %v422, %v421
    %v511 = vpack.c.b16 %v424, %v423
    %v512 = vpack.c.b16 %v426, %v425
    %v513 = vpack.c.b16 %v428, %v427
    %v514 = vpack.c.b16 %v430, %v429
    %v515 = vpack.c.b16 %v432, %v431
    %v516 = vpack.c.b16 %v434, %v433
    %v517 = vpack.c.b16 %v436, %v435
    %v518 = vpack.c.b16 %v438, %v437
    %v519 = vpack.c.b16 %v440, %v439
    %v520 = vpack.c.b16 %v442, %v441
    %v521 = vpack.c.b16 %v444, %v443
    %v522 = vpack.c.b16 %v446, %v445
    %v523 = vpack.c.b16 %v448, %v447
    %v524 = vpack.c.b16 %v450, %v449
    %v525 = vpack.c.b16 %v452, %v451
    %v526 = vpack.c.b16 %v454, %v453
    %v527 = vpack.c.b16 %v456, %v455
    %v528 = vpack.c.b16 %v458, %v457
    %v529 = vpack.c.b16 %v460, %v459
    %v530 = vpack.c.b16 %v462, %v461
    %v531 = vpack.c.b16 %v464, %v463
    %v532 = vpack.c.b16 %v466, %v465
    %v533 = vpack.c.b16 %v468, %v467
    %v534 = vpack.c.b16 %v470, %v469
    %599 = vmatprep.subr.bf16.mxu0 0
    %600 = vmatpush1.bf16.msra.mxu0 %v471
    %601 = vmatprep.subr.bf16.mxu0 0
    %602 = vmatpush1.bf16.msra.mxu0 %v472
    %603 = vmatprep.subr.bf16.mxu0 0
    %604 = vmatpush1.bf16.msra.mxu0 %v473
    %605 = vmatprep.subr.bf16.mxu0 0
    %606 = vmatpush1.bf16.msra.mxu0 %v474
    %607 = vmatprep.subr.bf16.mxu0 0
    %608 = vmatpush1.bf16.msra.mxu0 %v475
    %609 = vmatprep.subr.bf16.mxu0 0
    %610 = vmatpush1.bf16.msra.mxu0 %v476
    %611 = vmatprep.subr.bf16.mxu0 0
    %612 = vmatpush1.bf16.msra.mxu0 %v477
    %613 = vmatprep.subr.bf16.mxu0 0
    %614 = vmatpush1.bf16.msra.mxu0 %v478
    %615 = vmatprep.subr.bf16.mxu0 0
    %616 = vmatpush1.bf16.msra.mxu0 %v479
    %617 = vmatprep.subr.bf16.mxu0 0
    %618 = vmatpush1.bf16.msra.mxu0 %v480
    %619 = vmatprep.subr.bf16.mxu0 0
    %620 = vmatpush1.bf16.msra.mxu0 %v481
    %621 = vmatprep.subr.bf16.mxu0 0
    %622 = vmatpush1.bf16.msra.mxu0 %v482
    %623 = vmatprep.subr.bf16.mxu0 0
    %624 = vmatpush1.bf16.msra.mxu0 %v483
    %625 = vmatprep.subr.bf16.mxu0 0
    %626 = vmatpush1.bf16.msra.mxu0 %v484
    %627 = vmatprep.subr.bf16.mxu0 0
    %628 = vmatpush1.bf16.msra.mxu0 %v485
    %629 = vmatprep.subr.bf16.mxu0 0
    %630 = vmatpush1.bf16.msra.mxu0 %v486
    %631 = vmatprep.mubr.bf16.mxu0 %v73
    %632 = vmatmul.mubr.bf16.gmra.mrb[0].mxu0 %v72
    %v633 = vpop.f32.mrb[0].mxu0
    %v634 = vadd.f32 %v213, %v633
    %v635 = vpop.f32.mrb[0].mxu0
    %v636 = vpop.f32.mrb[0].mxu0
    %v637 = vpop.f32.mrb[0].mxu0
    %638 = vdwg.mxu0
    %639 = vmatprep.subr.bf16.mxu0 0
    %640 = vmatpush1.bf16.msra.mxu0 %v487
    %641 = vmatprep.subr.bf16.mxu0 0
    %642 = vmatpush1.bf16.msra.mxu0 %v488
    %643 = vmatprep.subr.bf16.mxu0 0
    %644 = vmatpush1.bf16.msra.mxu0 %v489
    %645 = vmatprep.subr.bf16.mxu0 0
    %646 = vmatpush1.bf16.msra.mxu0 %v490
    %647 = vmatprep.subr.bf16.mxu0 0
    %648 = vmatpush1.bf16.msra.mxu0 %v491
    %649 = vmatprep.subr.bf16.mxu0 0
    %650 = vmatpush1.bf16.msra.mxu0 %v492
    %651 = vmatprep.subr.bf16.mxu0 0
    %652 = vmatpush1.bf16.msra.mxu0 %v493
    %653 = vmatprep.subr.bf16.mxu0 0
    %654 = vmatpush1.bf16.msra.mxu0 %v494
    %655 = vmatprep.subr.bf16.mxu0 0
    %656 = vmatpush1.bf16.msra.mxu0 %v495
    %657 = vmatprep.subr.bf16.mxu0 0
    %658 = vmatpush1.bf16.msra.mxu0 %v496
    %659 = vmatprep.subr.bf16.mxu0 0
    %660 = vmatpush1.bf16.msra.mxu0 %v497
    %661 = vmatprep.subr.bf16.mxu0 0
    %662 = vmatpush1.bf16.msra.mxu0 %v498
    %663 = vmatprep.subr.bf16.mxu0 0
    %664 = vmatpush1.bf16.msra.mxu0 %v499
    %665 = vmatprep.subr.bf16.mxu0 0
    %666 = vmatpush1.bf16.msra.mxu0 %v500
    %667 = vmatprep.subr.bf16.mxu0 0
    %668 = vmatpush1.bf16.msra.mxu0 %v501
    %669 = vmatprep.subr.bf16.mxu0 0
    %670 = vmatpush1.bf16.msra.mxu0 %v502
    %671 = vmatprep.mubr.bf16.mxu0 %v75
    %672 = vmatmul.mubr.bf16.gmra.mrb[0].mxu0 %v74
    %v673 = vpop.f32.mrb[0].mxu0
    %v674 = vadd.f32 %v634, %v673
    %v675 = vpop.f32.mrb[0].mxu0
    %v676 = vpop.f32.mrb[0].mxu0
    %v677 = vpop.f32.mrb[0].mxu0
    %678 = vdwg.mxu0
    %679 = vmatprep.subr.bf16.mxu0 0
    %680 = vmatpush1.bf16.msra.mxu0 %v503
    %681 = vmatprep.subr.bf16.mxu0 0
    %682 = vmatpush1.bf16.msra.mxu0 %v504
    %683 = vmatprep.subr.bf16.mxu0 0
    %684 = vmatpush1.bf16.msra.mxu0 %v505
    %685 = vmatprep.subr.bf16.mxu0 0
    %686 = vmatpush1.bf16.msra.mxu0 %v506
    %687 = vmatprep.subr.bf16.mxu0 0
    %688 = vmatpush1.bf16.msra.mxu0 %v507
    %689 = vmatprep.subr.bf16.mxu0 0
    %690 = vmatpush1.bf16.msra.mxu0 %v508
    %691 = vmatprep.subr.bf16.mxu0 0
    %692 = vmatpush1.bf16.msra.mxu0 %v509
    %693 = vmatprep.subr.bf16.mxu0 0
    %694 = vmatpush1.bf16.msra.mxu0 %v510
    %695 = vmatprep.subr.bf16.mxu0 0
    %696 = vmatpush1.bf16.msra.mxu0 %v511
    %697 = vmatprep.subr.bf16.mxu0 0
    %698 = vmatpush1.bf16.msra.mxu0 %v512
    %699 = vmatprep.subr.bf16.mxu0 0
    %700 = vmatpush1.bf16.msra.mxu0 %v513
    %701 = vmatprep.subr.bf16.mxu0 0
    %702 = vmatpush1.bf16.msra.mxu0 %v514
    %703 = vmatprep.subr.bf16.mxu0 0
    %704 = vmatpush1.bf16.msra.mxu0 %v515
    %705 = vmatprep.subr.bf16.mxu0 0
    %706 = vmatpush1.bf16.msra.mxu0 %v516
    %707 = vmatprep.subr.bf16.mxu0 0
    %708 = vmatpush1.bf16.msra.mxu0 %v517
    %709 = vmatprep.subr.bf16.mxu0 0
    %710 = vmatpush1.bf16.msra.mxu0 %v518
    %711 = vmatprep.mubr.bf16.mxu0 %v77
    %712 = vmatmul.mubr.bf16.gmra.mrb[0].mxu0 %v76
    %v713 = vpop.f32.mrb[0].mxu0
    %v714 = vadd.f32 %v674, %v713
    %v715 = vpop.f32.mrb[0].mxu0
    %v716 = vpop.f32.mrb[0].mxu0
    %v717 = vpop.f32.mrb[0].mxu0
    %718 = vdwg.mxu0
    %719 = vmatprep.subr.bf16.mxu0 0
    %720 = vmatpush1.bf16.msra.mxu0 %v519
    %721 = vmatprep.subr.bf16.mxu0 0
    %722 = vmatpush1.bf16.msra.mxu0 %v520
    %723 = vmatprep.subr.bf16.mxu0 0
    %724 = vmatpush1.bf16.msra.mxu0 %v521
    %725 = vmatprep.subr.bf16.mxu0 0
    %726 = vmatpush1.bf16.msra.mxu0 %v522
    %727 = vmatprep.subr.bf16.mxu0 0
    %728 = vmatpush1.bf16.msra.mxu0 %v523
    %729 = vmatprep.subr.bf16.mxu0 0
    %730 = vmatpush1.bf16.msra.mxu0 %v524
    %731 = vmatprep.subr.bf16.mxu0 0
    %732 = vmatpush1.bf16.msra.mxu0 %v525
    %733 = vmatprep.subr.bf16.mxu0 0
    %734 = vmatpush1.bf16.msra.mxu0 %v526
    %735 = vmatprep.subr.bf16.mxu0 0
    %736 = vmatpush1.bf16.msra.mxu0 %v527
    %737 = vmatprep.subr.bf16.mxu0 0
    %738 = vmatpush1.bf16.msra.mxu0 %v528
    %739 = vmatprep.subr.bf16.mxu0 0
    %740 = vmatpush1.bf16.msra.mxu0 %v529
    %741 = vmatprep.subr.bf16.mxu0 0
    %742 = vmatpush1.bf16.msra.mxu0 %v530
    %743 = vmatprep.subr.bf16.mxu0 0
    %744 = vmatpush1.bf16.msra.mxu0 %v531
    %745 = vmatprep.subr.bf16.mxu0 0
    %746 = vmatpush1.bf16.msra.mxu0 %v532
    %747 = vmatprep.subr.bf16.mxu0 0
    %748 = vmatpush1.bf16.msra.mxu0 %v533
    %749 = vmatprep.subr.bf16.mxu0 0
    %750 = vmatpush1.bf16.msra.mxu0 %v534
    %751 = vmatprep.mubr.bf16.mxu0 %v79
    %752 = vmatmul.mubr.bf16.gmra.mrb[0].mxu0 %v78
    %v753 = vpop.f32.mrb[0].mxu0
    %v754 = vadd.f32 %v714, %v753
    %v755 = vpop.f32.mrb[0].mxu0
    %v756 = vpop.f32.mrb[0].mxu0
    %v757 = vpop.f32.mrb[0].mxu0
    %758 = vdwg.mxu0
    %v759 = vpack.c.bf16 %v754, %v754
    %760 = vst [vmem:[#allocation9] sm:$0xf] %v759
    %v761 = vld [vmem:[#allocation7] sm:$0xff]
    %v762 = vld [vmem:[#allocation7 + $0x8] sm:$0xff]
    %v763 = vld [vmem:[#allocation7 + $0x10] sm:$0xff]
    %v764 = vld [vmem:[#allocation7 + $0x18] sm:$0xff]
    %v765 = vld [vmem:[#allocation7 + $0x20] sm:$0xff]
    %v766 = vld [vmem:[#allocation7 + $0x28] sm:$0xff]
    %v767 = vld [vmem:[#allocation7 + $0x30] sm:$0xff]
    %v768 = vld [vmem:[#allocation7 + $0x38] sm:$0xff]
    %v769 = vld [vmem:[#allocation7 + $0x40] sm:$0xff]
    %v770 = vld [vmem:[#allocation7 + $0x48] sm:$0xff]
    %v771 = vld [vmem:[#allocation7 + $0x50] sm:$0xff]
    %v772 = vld [vmem:[#allocation7 + $0x58] sm:$0xff]
    %v773 = vld [vmem:[#allocation7 + $0x60] sm:$0xff]
    %v774 = vld [vmem:[#allocation7 + $0x68] sm:$0xff]
    %v775 = vld [vmem:[#allocation7 + $0x70] sm:$0xff]
    %v776 = vld [vmem:[#allocation7 + $0x78] sm:$0xff]
    %v777 = vld [vmem:[#allocation7 + $0x80] sm:$0xff]
    %v778 = vld [vmem:[#allocation7 + $0x88] sm:$0xff]
    %v779 = vld [vmem:[#allocation7 + $0x90] sm:$0xff]
    %v780 = vld [vmem:[#allocation7 + $0x98] sm:$0xff]
    %v781 = vld [vmem:[#allocation7 + $0xa0] sm:$0xff]
    %v782 = vld [vmem:[#allocation7 + $0xa8] sm:$0xff]
    %v783 = vld [vmem:[#allocation7 + $0xb0] sm:$0xff]
    %v784 = vld [vmem:[#allocation7 + $0xb8] sm:$0xff]
    %v785 = vld [vmem:[#allocation7 + $0xc0] sm:$0xff]
    %v786 = vld [vmem:[#allocation7 + $0xc8] sm:$0xff]
    %v787 = vld [vmem:[#allocation7 + $0xd0] sm:$0xff]
    %v788 = vld [vmem:[#allocation7 + $0xd8] sm:$0xff]
    %v789 = vld [vmem:[#allocation7 + $0xe0] sm:$0xff]
    %v790 = vld [vmem:[#allocation7 + $0xe8] sm:$0xff]
    %v791 = vld [vmem:[#allocation7 + $0xf0] sm:$0xff]
    %v792 = vld [vmem:[#allocation7 + $0xf8] sm:$0xff]
    %v793 = vld [vmem:[#allocation7 + $0x100] sm:$0xff]
    %v794 = vld [vmem:[#allocation7 + $0x108] sm:$0xff]
    %v795 = vld [vmem:[#allocation7 + $0x110] sm:$0xff]
    %v796 = vld [vmem:[#allocation7 + $0x118] sm:$0xff]
    %v797 = vld [vmem:[#allocation7 + $0x120] sm:$0xff]
    %v798 = vld [vmem:[#allocation7 + $0x128] sm:$0xff]
    %v799 = vld [vmem:[#allocation7 + $0x130] sm:$0xff]
    %v800 = vld [vmem:[#allocation7 + $0x138] sm:$0xff]
    %v801 = vld [vmem:[#allocation7 + $0x140] sm:$0xff]
    %v802 = vld [vmem:[#allocation7 + $0x148] sm:$0xff]
    %v803 = vld [vmem:[#allocation7 + $0x150] sm:$0xff]
    %v804 = vld [vmem:[#allocation7 + $0x158] sm:$0xff]
    %v805 = vld [vmem:[#allocation7 + $0x160] sm:$0xff]
    %v806 = vld [vmem:[#allocation7 + $0x168] sm:$0xff]
    %v807 = vld [vmem:[#allocation7 + $0x170] sm:$0xff]
    %v808 = vld [vmem:[#allocation7 + $0x178] sm:$0xff]
    %v809 = vld [vmem:[#allocation7 + $0x180] sm:$0xff]
    %v810 = vld [vmem:[#allocation7 + $0x188] sm:$0xff]
    %v811 = vld [vmem:[#allocation7 + $0x190] sm:$0xff]
    %v812 = vld [vmem:[#allocation7 + $0x198] sm:$0xff]
    %v813 = vld [vmem:[#allocation7 + $0x1a0] sm:$0xff]
    %v814 = vld [vmem:[#allocation7 + $0x1a8] sm:$0xff]
    %v815 = vld [vmem:[#allocation7 + $0x1b0] sm:$0xff]
    %v816 = vld [vmem:[#allocation7 + $0x1b8] sm:$0xff]
    %v817 = vld [vmem:[#allocation7 + $0x1c0] sm:$0xff]
    %v818 = vld [vmem:[#allocation7 + $0x1c8] sm:$0xff]
    %v819 = vld [vmem:[#allocation7 + $0x1d0] sm:$0xff]
    %v820 = vld [vmem:[#allocation7 + $0x1d8] sm:$0xff]
    %v821 = vld [vmem:[#allocation7 + $0x1e0] sm:$0xff]
    %v822 = vld [vmem:[#allocation7 + $0x1e8] sm:$0xff]
    %v823 = vld [vmem:[#allocation7 + $0x1f0] sm:$0xff]
    %v824 = vld [vmem:[#allocation7 + $0x1f8] sm:$0xff]
    %v825 = vld [vmem:[%s4] sm:$0xff]
    %v827 = vlaneseq
    %v828 = vshrl.u32 %v827, 7
    %v829 = vsub.s32 0, %v828
    %v830 = vrot.slane %v825, %v829
    %v831 = vlaneseq
    %v832 = vshrl.u32 %v831, 7
    %v833 = vsub.s32 1, %v832
    %v834 = vrot.slane %v825, %v833
    %v835 = vlaneseq
    %v836 = vshrl.u32 %v835, 7
    %v837 = vsub.s32 2, %v836
    %v838 = vrot.slane %v825, %v837
    %v839 = vlaneseq
    %v840 = vshrl.u32 %v839, 7
    %v841 = vsub.s32 3, %v840
    %v842 = vrot.slane %v825, %v841
    %v843 = vlaneseq
    %v844 = vshrl.u32 %v843, 7
    %v845 = vsub.s32 4, %v844
    %v846 = vrot.slane %v825, %v845
    %v847 = vlaneseq
    %v848 = vshrl.u32 %v847, 7
    %v849 = vsub.s32 5, %v848
    %v850 = vrot.slane %v825, %v849
    %v851 = vlaneseq
    %v852 = vshrl.u32 %v851, 7
    %v853 = vsub.s32 6, %v852
    %v854 = vrot.slane %v825, %v853
    %v855 = vlaneseq
    %v856 = vshrl.u32 %v855, 7
    %v857 = vsub.s32 7, %v856
    %v858 = vrot.slane %v825, %v857
    %v931 = vunpack.c.l.b16 %v761
    %v932 = vunpack.c.h.b16 %v761
    %v933 = vunpack.c.l.b16 %v762
    %v934 = vunpack.c.h.b16 %v762
    %v935 = vunpack.c.l.b16 %v763
    %v936 = vunpack.c.h.b16 %v763
    %v937 = vunpack.c.l.b16 %v764
    %v938 = vunpack.c.h.b16 %v764
    %v939 = vunpack.c.l.b16 %v765
    %v940 = vunpack.c.h.b16 %v765
    %v941 = vunpack.c.l.b16 %v766
    %v942 = vunpack.c.h.b16 %v766
    %v943 = vunpack.c.l.b16 %v767
    %v944 = vunpack.c.h.b16 %v767
    %v945 = vunpack.c.l.b16 %v768
    %v946 = vunpack.c.h.b16 %v768
    %v947 = vunpack.c.l.b16 %v769
    %v948 = vunpack.c.h.b16 %v769
    %v949 = vunpack.c.l.b16 %v770
    %v950 = vunpack.c.h.b16 %v770
    %v951 = vunpack.c.l.b16 %v771
    %v952 = vunpack.c.h.b16 %v771
    %v953 = vunpack.c.l.b16 %v772
    %v954 = vunpack.c.h.b16 %v772
    %v955 = vunpack.c.l.b16 %v773
    %v956 = vunpack.c.h.b16 %v773
    %v957 = vunpack.c.l.b16 %v774
    %v958 = vunpack.c.h.b16 %v774
    %v959 = vunpack.c.l.b16 %v775
    %v960 = vunpack.c.h.b16 %v775
    %v961 = vunpack.c.l.b16 %v776
    %v962 = vunpack.c.h.b16 %v776
    %v963 = vunpack.c.l.b16 %v777
    %v964 = vunpack.c.h.b16 %v777
    %v965 = vunpack.c.l.b16 %v778
    %v966 = vunpack.c.h.b16 %v778
    %v967 = vunpack.c.l.b16 %v779
    %v968 = vunpack.c.h.b16 %v779
    %v969 = vunpack.c.l.b16 %v780
    %v970 = vunpack.c.h.b16 %v780
    %v971 = vunpack.c.l.b16 %v781
    %v972 = vunpack.c.h.b16 %v781
    %v973 = vunpack.c.l.b16 %v782
    %v974 = vunpack.c.h.b16 %v782
    %v975 = vunpack.c.l.b16 %v783
    %v976 = vunpack.c.h.b16 %v783
    %v977 = vunpack.c.l.b16 %v784
    %v978 = vunpack.c.h.b16 %v784
    %v979 = vunpack.c.l.b16 %v785
    %v980 = vunpack.c.h.b16 %v785
    %v981 = vunpack.c.l.b16 %v786
    %v982 = vunpack.c.h.b16 %v786
    %v983 = vunpack.c.l.b16 %v787
    %v984 = vunpack.c.h.b16 %v787
    %v985 = vunpack.c.l.b16 %v788
    %v986 = vunpack.c.h.b16 %v788
    %v987 = vunpack.c.l.b16 %v789
    %v988 = vunpack.c.h.b16 %v789
    %v989 = vunpack.c.l.b16 %v790
    %v990 = vunpack.c.h.b16 %v790
    %v991 = vunpack.c.l.b16 %v791
    %v992 = vunpack.c.h.b16 %v791
    %v993 = vunpack.c.l.b16 %v792
    %v994 = vunpack.c.h.b16 %v792
    %v995 = vunpack.c.l.b16 %v793
    %v996 = vunpack.c.h.b16 %v793
    %v997 = vunpack.c.l.b16 %v794
    %v998 = vunpack.c.h.b16 %v794
    %v999 = vunpack.c.l.b16 %v795
    %v1000 = vunpack.c.h.b16 %v795
    %v1001 = vunpack.c.l.b16 %v796
    %v1002 = vunpack.c.h.b16 %v796
    %v1003 = vunpack.c.l.b16 %v797
    %v1004 = vunpack.c.h.b16 %v797
    %v1005 = vunpack.c.l.b16 %v798
    %v1006 = vunpack.c.h.b16 %v798
    %v1007 = vunpack.c.l.b16 %v799
    %v1008 = vunpack.c.h.b16 %v799
    %v1009 = vunpack.c.l.b16 %v800
    %v1010 = vunpack.c.h.b16 %v800
    %v1011 = vunpack.c.l.b16 %v801
    %v1012 = vunpack.c.h.b16 %v801
    %v1013 = vunpack.c.l.b16 %v802
    %v1014 = vunpack.c.h.b16 %v802
    %v1015 = vunpack.c.l.b16 %v803
    %v1016 = vunpack.c.h.b16 %v803
    %v1017 = vunpack.c.l.b16 %v804
    %v1018 = vunpack.c.h.b16 %v804
    %v1019 = vunpack.c.l.b16 %v805
    %v1020 = vunpack.c.h.b16 %v805
    %v1021 = vunpack.c.l.b16 %v806
    %v1022 = vunpack.c.h.b16 %v806
    %v1023 = vunpack.c.l.b16 %v807
    %v1024 = vunpack.c.h.b16 %v807
    %v1025 = vunpack.c.l.b16 %v808
    %v1026 = vunpack.c.h.b16 %v808
    %v1027 = vunpack.c.l.b16 %v809
    %v1028 = vunpack.c.h.b16 %v809
    %v1029 = vunpack.c.l.b16 %v810
    %v1030 = vunpack.c.h.b16 %v810
    %v1031 = vunpack.c.l.b16 %v811
    %v1032 = vunpack.c.h.b16 %v811
    %v1033 = vunpack.c.l.b16 %v812
    %v1034 = vunpack.c.h.b16 %v812
    %v1035 = vunpack.c.l.b16 %v813
    %v1036 = vunpack.c.h.b16 %v813
    %v1037 = vunpack.c.l.b16 %v814
    %v1038 = vunpack.c.h.b16 %v814
    %v1039 = vunpack.c.l.b16 %v815
    %v1040 = vunpack.c.h.b16 %v815
    %v1041 = vunpack.c.l.b16 %v816
    %v1042 = vunpack.c.h.b16 %v816
    %v1043 = vunpack.c.l.b16 %v817
    %v1044 = vunpack.c.h.b16 %v817
    %v1045 = vunpack.c.l.b16 %v818
    %v1046 = vunpack.c.h.b16 %v818
    %v1047 = vunpack.c.l.b16 %v819
    %v1048 = vunpack.c.h.b16 %v819
    %v1049 = vunpack.c.l.b16 %v820
    %v1050 = vunpack.c.h.b16 %v820
    %v1051 = vunpack.c.l.b16 %v821
    %v1052 = vunpack.c.h.b16 %v821
    %v1053 = vunpack.c.l.b16 %v822
    %v1054 = vunpack.c.h.b16 %v822
    %v1055 = vunpack.c.l.b16 %v823
    %v1056 = vunpack.c.h.b16 %v823
    %v1057 = vunpack.c.l.b16 %v824
    %v1058 = vunpack.c.h.b16 %v824
    %v1059 = vpack.c.b16 %v939, %v931
    %v1060 = vpack.c.b16 %v940, %v932
    %v1061 = vpack.c.b16 %v941, %v933
    %v1062 = vpack.c.b16 %v942, %v934
    %v1063 = vpack.c.b16 %v943, %v935
    %v1064 = vpack.c.b16 %v944, %v936
    %v1065 = vpack.c.b16 %v945, %v937
    %v1066 = vpack.c.b16 %v946, %v938
    %v1067 = vpack.c.b16 %v955, %v947
    %v1068 = vpack.c.b16 %v956, %v948
    %v1069 = vpack.c.b16 %v957, %v949
    %v1070 = vpack.c.b16 %v958, %v950
    %v1071 = vpack.c.b16 %v959, %v951
    %v1072 = vpack.c.b16 %v960, %v952
    %v1073 = vpack.c.b16 %v961, %v953
    %v1074 = vpack.c.b16 %v962, %v954
    %v1075 = vpack.c.b16 %v971, %v963
    %v1076 = vpack.c.b16 %v972, %v964
    %v1077 = vpack.c.b16 %v973, %v965
    %v1078 = vpack.c.b16 %v974, %v966
    %v1079 = vpack.c.b16 %v975, %v967
    %v1080 = vpack.c.b16 %v976, %v968
    %v1081 = vpack.c.b16 %v977, %v969
    %v1082 = vpack.c.b16 %v978, %v970
    %v1083 = vpack.c.b16 %v987, %v979
    %v1084 = vpack.c.b16 %v988, %v980
    %v1085 = vpack.c.b16 %v989, %v981
    %v1086 = vpack.c.b16 %v990, %v982
    %v1087 = vpack.c.b16 %v991, %v983
    %v1088 = vpack.c.b16 %v992, %v984
    %v1089 = vpack.c.b16 %v993, %v985
    %v1090 = vpack.c.b16 %v994, %v986
    %v1091 = vpack.c.b16 %v1003, %v995
    %v1092 = vpack.c.b16 %v1004, %v996
    %v1093 = vpack.c.b16 %v1005, %v997
    %v1094 = vpack.c.b16 %v1006, %v998
    %v1095 = vpack.c.b16 %v1007, %v999
    %v1096 = vpack.c.b16 %v1008, %v1000
    %v1097 = vpack.c.b16 %v1009, %v1001
    %v1098 = vpack.c.b16 %v1010, %v1002
    %v1099 = vpack.c.b16 %v1019, %v1011
    %v1100 = vpack.c.b16 %v1020, %v1012
    %v1101 = vpack.c.b16 %v1021, %v1013
    %v1102 = vpack.c.b16 %v1022, %v1014
    %v1103 = vpack.c.b16 %v1023, %v1015
    %v1104 = vpack.c.b16 %v1024, %v1016
    %v1105 = vpack.c.b16 %v1025, %v1017
    %v1106 = vpack.c.b16 %v1026, %v1018
    %v1107 = vpack.c.b16 %v1035, %v1027
    %v1108 = vpack.c.b16 %v1036, %v1028
    %v1109 = vpack.c.b16 %v1037, %v1029
    %v1110 = vpack.c.b16 %v1038, %v1030
    %v1111 = vpack.c.b16 %v1039, %v1031
    %v1112 = vpack.c.b16 %v1040, %v1032
    %v1113 = vpack.c.b16 %v1041, %v1033
    %v1114 = vpack.c.b16 %v1042, %v1034
    %v1115 = vpack.c.b16 %v1051, %v1043
    %v1116 = vpack.c.b16 %v1052, %v1044
    %v1117 = vpack.c.b16 %v1053, %v1045
    %v1118 = vpack.c.b16 %v1054, %v1046
    %v1119 = vpack.c.b16 %v1055, %v1047
    %v1120 = vpack.c.b16 %v1056, %v1048
    %v1121 = vpack.c.b16 %v1057, %v1049
    %v1122 = vpack.c.b16 %v1058, %v1050
    %1187 = vmatprep.subr.bf16.mxu0 %v1060
    %1188 = vmatpush1.bf16.msra.mxu0 %v1059
    %1189 = vmatprep.subr.bf16.mxu0 %v1068
    %1190 = vmatpush1.bf16.msra.mxu0 %v1067
    %1191 = vmatprep.subr.bf16.mxu0 %v1076
    %1192 = vmatpush1.bf16.msra.mxu0 %v1075
    %1193 = vmatprep.subr.bf16.mxu0 %v1084
    %1194 = vmatpush1.bf16.msra.mxu0 %v1083
    %1195 = vmatprep.subr.bf16.mxu0 %v1092
    %1196 = vmatpush1.bf16.msra.mxu0 %v1091
    %1197 = vmatprep.subr.bf16.mxu0 %v1100
    %1198 = vmatpush1.bf16.msra.mxu0 %v1099
    %1199 = vmatprep.subr.bf16.mxu0 %v1108
    %1200 = vmatpush1.bf16.msra.mxu0 %v1107
    %1201 = vmatprep.subr.bf16.mxu0 %v1116
    %1202 = vmatpush1.bf16.msra.mxu0 %v1115
    %1203 = vmatprep.subr.bf16.mxu0 0
    %1204 = vmatpush1.bf16.msra.mxu0 0
    %1205 = vmatprep.subr.bf16.mxu0 0
    %1206 = vmatpush1.bf16.msra.mxu0 0
    %1207 = vmatprep.subr.bf16.mxu0 0
    %1208 = vmatpush1.bf16.msra.mxu0 0
    %1209 = vmatprep.subr.bf16.mxu0 0
    %1210 = vmatpush1.bf16.msra.mxu0 0
    %1211 = vmatprep.subr.bf16.mxu0 0
    %1212 = vmatpush1.bf16.msra.mxu0 0
    %1213 = vmatprep.subr.bf16.mxu0 0
    %1214 = vmatpush1.bf16.msra.mxu0 0
    %1215 = vmatprep.subr.bf16.mxu0 0
    %1216 = vmatpush1.bf16.msra.mxu0 0
    %1217 = vmatprep.subr.bf16.mxu0 0
    %1218 = vmatpush1.bf16.msra.mxu0 0
    %1219 = vmatprep.mubr.bf16.mxu0 0
    %1220 = vmatmul.mubr.bf16.gmra.mrb[0].mxu0 %v759
    %v1221 = vpop.f32.mrb[0].mxu0
    %v1222 = vadd.f32 %v830, %v1221
    %v1223 = vpop.f32.mrb[0].mxu0
    %v1224 = vadd.f32 %v834, %v1223
    %v1225 = vpop.f32.mrb[0].mxu0
    %v1226 = vpop.f32.mrb[0].mxu0
    %1227 = vdwg.mxu0
    %1228 = vmatprep.subr.bf16.mxu0 %v1062
    %1229 = vmatpush1.bf16.msra.mxu0 %v1061
    %1230 = vmatprep.subr.bf16.mxu0 %v1070
    %1231 = vmatpush1.bf16.msra.mxu0 %v1069
    %1232 = vmatprep.subr.bf16.mxu0 %v1078
    %1233 = vmatpush1.bf16.msra.mxu0 %v1077
    %1234 = vmatprep.subr.bf16.mxu0 %v1086
    %1235 = vmatpush1.bf16.msra.mxu0 %v1085
    %1236 = vmatprep.subr.bf16.mxu0 %v1094
    %1237 = vmatpush1.bf16.msra.mxu0 %v1093
    %1238 = vmatprep.subr.bf16.mxu0 %v1102
    %1239 = vmatpush1.bf16.msra.mxu0 %v1101
    %1240 = vmatprep.subr.bf16.mxu0 %v1110
    %1241 = vmatpush1.bf16.msra.mxu0 %v1109
    %1242 = vmatprep.subr.bf16.mxu0 %v1118
    %1243 = vmatpush1.bf16.msra.mxu0 %v1117
    %1244 = vmatprep.subr.bf16.mxu0 0
    %1245 = vmatpush1.bf16.msra.mxu0 0
    %1246 = vmatprep.subr.bf16.mxu0 0
    %1247 = vmatpush1.bf16.msra.mxu0 0
    %1248 = vmatprep.subr.bf16.mxu0 0
    %1249 = vmatpush1.bf16.msra.mxu0 0
    %1250 = vmatprep.subr.bf16.mxu0 0
    %1251 = vmatpush1.bf16.msra.mxu0 0
    %1252 = vmatprep.subr.bf16.mxu0 0
    %1253 = vmatpush1.bf16.msra.mxu0 0
    %1254 = vmatprep.subr.bf16.mxu0 0
    %1255 = vmatpush1.bf16.msra.mxu0 0
    %1256 = vmatprep.subr.bf16.mxu0 0
    %1257 = vmatpush1.bf16.msra.mxu0 0
    %1258 = vmatprep.subr.bf16.mxu0 0
    %1259 = vmatpush1.bf16.msra.mxu0 0
    %1260 = vmatprep.mubr.bf16.mxu0 0
    %1261 = vmatmul.mubr.bf16.gmra.mrb[0].mxu0 %v759
    %v1262 = vpop.f32.mrb[0].mxu0
    %v1263 = vadd.f32 %v838, %v1262
    %v1264 = vpop.f32.mrb[0].mxu0
    %v1265 = vadd.f32 %v842, %v1264
    %v1266 = vpop.f32.mrb[0].mxu0
    %v1267 = vpop.f32.mrb[0].mxu0
    %1268 = vdwg.mxu0
    %1269 = vmatprep.subr.bf16.mxu0 %v1064
    %1270 = vmatpush1.bf16.msra.mxu0 %v1063
    %1271 = vmatprep.subr.bf16.mxu0 %v1072
    %1272 = vmatpush1.bf16.msra.mxu0 %v1071
    %1273 = vmatprep.subr.bf16.mxu0 %v1080
    %1274 = vmatpush1.bf16.msra.mxu0 %v1079
    %1275 = vmatprep.subr.bf16.mxu0 %v1088
    %1276 = vmatpush1.bf16.msra.mxu0 %v1087
    %1277 = vmatprep.subr.bf16.mxu0 %v1096
    %1278 = vmatpush1.bf16.msra.mxu0 %v1095
    %1279 = vmatprep.subr.bf16.mxu0 %v1104
    %1280 = vmatpush1.bf16.msra.mxu0 %v1103
    %1281 = vmatprep.subr.bf16.mxu0 %v1112
    %1282 = vmatpush1.bf16.msra.mxu0 %v1111
    %1283 = vmatprep.subr.bf16.mxu0 %v1120
    %1284 = vmatpush1.bf16.msra.mxu0 %v1119
    %1285 = vmatprep.subr.bf16.mxu0 0
    %1286 = vmatpush1.bf16.msra.mxu0 0
    %1287 = vmatprep.subr.bf16.mxu0 0
    %1288 = vmatpush1.bf16.msra.mxu0 0
    %1289 = vmatprep.subr.bf16.mxu0 0
    %1290 = vmatpush1.bf16.msra.mxu0 0
    %1291 = vmatprep.subr.bf16.mxu0 0
    %1292 = vmatpush1.bf16.msra.mxu0 0
    %1293 = vmatprep.subr.bf16.mxu0 0
    %1294 = vmatpush1.bf16.msra.mxu0 0
    %1295 = vmatprep.subr.bf16.mxu0 0
    %1296 = vmatpush1.bf16.msra.mxu0 0
    %1297 = vmatprep.subr.bf16.mxu0 0
    %1298 = vmatpush1.bf16.msra.mxu0 0
    %1299 = vmatprep.subr.bf16.mxu0 0
    %1300 = vmatpush1.bf16.msra.mxu0 0
    %1301 = vmatprep.mubr.bf16.mxu0 0
    %1302 = vmatmul.mubr.bf16.gmra.mrb[0].mxu0 %v759
    %v1303 = vpop.f32.mrb[0].mxu0
    %v1304 = vadd.f32 %v846, %v1303
    %v1305 = vpop.f32.mrb[0].mxu0
    %v1306 = vadd.f32 %v850, %v1305
    %v1307 = vpop.f32.mrb[0].mxu0
    %v1308 = vpop.f32.mrb[0].mxu0
    %1309 = vdwg.mxu0
    %1310 = vmatprep.subr.bf16.mxu0 %v1066
    %1311 = vmatpush1.bf16.msra.mxu0 %v1065
    %1312 = vmatprep.subr.bf16.mxu0 %v1074
    %1313 = vmatpush1.bf16.msra.mxu0 %v1073
    %1314 = vmatprep.subr.bf16.mxu0 %v1082
    %1315 = vmatpush1.bf16.msra.mxu0 %v1081
    %1316 = vmatprep.subr.bf16.mxu0 %v1090
    %1317 = vmatpush1.bf16.msra.mxu0 %v1089
    %1318 = vmatprep.subr.bf16.mxu0 %v1098
    %1319 = vmatpush1.bf16.msra.mxu0 %v1097
    %1320 = vmatprep.subr.bf16.mxu0 %v1106
    %1321 = vmatpush1.bf16.msra.mxu0 %v1105
    %1322 = vmatprep.subr.bf16.mxu0 %v1114
    %1323 = vmatpush1.bf16.msra.mxu0 %v1113
    %1324 = vmatprep.subr.bf16.mxu0 %v1122
    %1325 = vmatpush1.bf16.msra.mxu0 %v1121
    %1326 = vmatprep.subr.bf16.mxu0 0
    %1327 = vmatpush1.bf16.msra.mxu0 0
    %1328 = vmatprep.subr.bf16.mxu0 0
    %1329 = vmatpush1.bf16.msra.mxu0 0
    %1330 = vmatprep.subr.bf16.mxu0 0
    %1331 = vmatpush1.bf16.msra.mxu0 0
    %1332 = vmatprep.subr.bf16.mxu0 0
    %1333 = vmatpush1.bf16.msra.mxu0 0
    %1334 = vmatprep.subr.bf16.mxu0 0
    %1335 = vmatpush1.bf16.msra.mxu0 0
    %1336 = vmatprep.subr.bf16.mxu0 0
    %1337 = vmatpush1.bf16.msra.mxu0 0
    %1338 = vmatprep.subr.bf16.mxu0 0
    %1339 = vmatpush1.bf16.msra.mxu0 0
    %1340 = vmatprep.subr.bf16.mxu0 0
    %1341 = vmatpush1.bf16.msra.mxu0 0
    %1342 = vmatprep.mubr.bf16.mxu0 0
    %1343 = vmatmul.mubr.bf16.gmra.mrb[0].mxu0 %v759
    %v1344 = vpop.f32.mrb[0].mxu0
    %v1345 = vadd.f32 %v854, %v1344
    %v1346 = vpop.f32.mrb[0].mxu0
    %v1347 = vadd.f32 %v858, %v1346
    %v1348 = vpop.f32.mrb[0].mxu0
    %v1349 = vpop.f32.mrb[0].mxu0
    %1350 = vdwg.mxu0
    %v1351 = vxor.u32 %v1222, 2147483648
    %v1352 = vxor.u32 %v1224, 2147483648
    %v1353 = vxor.u32 %v1263, 2147483648
    %v1354 = vxor.u32 %v1265, 2147483648
    %v1355 = vxor.u32 %v1304, 2147483648
    %v1356 = vxor.u32 %v1306, 2147483648
    %v1357 = vxor.u32 %v1345, 2147483648
    %v1358 = vxor.u32 %v1347, 2147483648
    %v1359 = vmul.f32 %v1351, 1.442695
    %v1360 = vpow.pop %v1359
    %v1361 = vmul.f32 %v1352, 1.442695
    %v1362 = vpow.pop %v1361
    %v1363 = vmul.f32 %v1353, 1.442695
    %v1364 = vpow.pop %v1363
    %v1365 = vmul.f32 %v1354, 1.442695
    %v1366 = vpow.pop %v1365
    %v1367 = vmul.f32 %v1355, 1.442695
    %v1368 = vpow.pop %v1367
    %v1369 = vmul.f32 %v1356, 1.442695
    %v1370 = vpow.pop %v1369
    %v1371 = vmul.f32 %v1357, 1.442695
    %v1372 = vpow.pop %v1371
    %v1373 = vmul.f32 %v1358, 1.442695
    %v1374 = vpow.pop %v1373
    %v1375 = vadd.f32 %v1360, 1.0
    %v1376 = vadd.f32 %v1362, 1.0
    %v1377 = vadd.f32 %v1364, 1.0
    %v1378 = vadd.f32 %v1366, 1.0
    %v1379 = vadd.f32 %v1368, 1.0
    %v1380 = vadd.f32 %v1370, 1.0
    %v1381 = vadd.f32 %v1372, 1.0
    %v1382 = vadd.f32 %v1374, 1.0
    %v1383 = vrcp.pop %v1375
    %v1384 = vmul.f32 1.0, %v1383
    %v1385 = vrcp.pop %v1376
    %v1386 = vmul.f32 1.0, %v1385
    %v1387 = vrcp.pop %v1377
    %v1388 = vmul.f32 1.0, %v1387
    %v1389 = vrcp.pop %v1378
    %v1390 = vmul.f32 1.0, %v1389
    %v1391 = vrcp.pop %v1379
    %v1392 = vmul.f32 1.0, %v1391
    %v1393 = vrcp.pop %v1380
    %v1394 = vmul.f32 1.0, %v1393
    %v1395 = vrcp.pop %v1381
    %v1396 = vmul.f32 1.0, %v1395
    %v1397 = vrcp.pop %v1382
    %v1398 = vmul.f32 1.0, %v1397
    %v1399 = vpack.c.bf16 %v1384, %v1384
    %v1400 = vpack.c.bf16 %v1386, %v1386
    %v1401 = vpack.c.bf16 %v1388, %v1388
    %v1402 = vpack.c.bf16 %v1390, %v1390
    %v1403 = vpack.c.bf16 %v1392, %v1392
    %v1404 = vpack.c.bf16 %v1394, %v1394
    %v1405 = vpack.c.bf16 %v1396, %v1396
    %v1406 = vpack.c.bf16 %v1398, %v1398
    %v1415 = vunpack.c.l.b16 %v1399
    %v1416 = vunpack.c.l.b16 %v1400
    %v1417 = vunpack.c.l.b16 %v1401
    %v1418 = vunpack.c.l.b16 %v1402
    %v1419 = vunpack.c.l.b16 %v1403
    %v1420 = vunpack.c.l.b16 %v1404
    %v1421 = vunpack.c.l.b16 %v1405
    %v1422 = vunpack.c.l.b16 %v1406
    %v1423 = vpack.c.b16 %v1416, %v1415
    %v1424 = vpack.c.b16 %v1418, %v1417
    %v1425 = vpack.c.b16 %v1420, %v1419
    %v1426 = vpack.c.b16 %v1422, %v1421
    %1431 = vst [vmem:[#allocation8] sm:$0xff] %v1423
    %1432 = vst [vmem:[#allocation8 + $0x8] sm:$0xff] %v1424
    %1433 = vst [vmem:[#allocation8 + $0x10] sm:$0xff] %v1425
    %1434 = vst [vmem:[#allocation8 + $0x18] sm:$0xff] %v1426
    // Predicated region
    $region34: #{tpu_custom_call.1} parent=1 // pred_check
      _
    $region35: #{tpu_custom_call.1} parent=1 // pred_check_branch
      %1436 = sbr.rel (0) target = $region37
    $region36: #{tpu_custom_call.1} parent=1 // pred_region
      %s1438 = ssub.s32 512, 512
      %1439 = vsyncadd [#allocation4], %s1438
      %s1441 = sshll.u32 [#allocation8], 4
      %s1442 = int_to_ptr.vmem [resolvable:$true] %s1441
      %1444 = dma.vmem_to_hbm [thread:$0]  %s1442, 512, %s5, [#allocation4]
    $region37: #{tpu_custom_call.1} parent=1 // pred_fallthru
      _
    // Predicated region
    $region38: #{tpu_custom_call.1} parent=1 // pred_check
      _
    $region39: #{tpu_custom_call.1} parent=1 // pred_check_branch
      %1446 = sbr.rel (0) target = $region41
    $region40: #{tpu_custom_call.1} parent=1 // pred_region
      %s1448 = ssub.s32 64, 64
      %1449 = vsyncadd [#allocation10], %s1448
      %s1451 = sshll.u32 [#allocation9], 4
      %s1452 = int_to_ptr.vmem [resolvable:$true] %s1451
      %1454 = dma.vmem_to_hbm [thread:$0]  %s1452, 64, %s6, [#allocation10]
    $region41: #{tpu_custom_call.1} parent=1 // pred_fallthru
      _
    // Predicated region
    $region42: #{tpu_custom_call.1} parent=1 // pred_check
      _
    $region43: #{tpu_custom_call.1} parent=1 // pred_check_branch
      %1456 = sbr.rel (0) target = $region45
    $region44: #{tpu_custom_call.1} parent=1 // pred_region
      %1457 = dma.done [#allocation4], 512
    $region45: #{tpu_custom_call.1} parent=1 // pred_fallthru
      _
    // Predicated region
    $region46: #{tpu_custom_call.1} parent=1 // pred_check
      _
    $region47: #{tpu_custom_call.1} parent=1 // pred_check_branch
      %1459 = sbr.rel (0) target = $region49
    $region48: #{tpu_custom_call.1} parent=1 // pred_region
      %1460 = dma.done [#allocation10], 64
    $region49: #{tpu_custom_call.1} parent=1 // pred_fallthru
      _
    %1461 = vsyncpa [#allocation3], 1
    %1462 = vsyncpa [#allocation6], 1
    %1463 = vsyncpa [#allocation4], 1
    %1464 = vsyncpa [#allocation10], 1

</llo_original>
